<compile_context>
chip_gen: v7x
topology: tpu7x:2x2x1
jax: 0.10.0
libtpu: 0.0.40
codegen_flags: <defaults>
</compile_context>

<pallas_src>
import math
import functools

import jax
import jax.numpy as jnp
from jax import lax
from jax.experimental import pallas as pl
from jax.experimental.pallas import tpu as pltpu


def _mqa_kernel(xf_ref, xq_ref, wq_ref, bq_ref, wkv_ref, bkv_ref,
                wo_ref, bo_ref, o_ref, kv_ref, *,
                n_heads: int, head_dim: int, scale: float):
    # xf_ref:  (S, D)  bf16   full sequence (for shared K/V projection)
    # xq_ref:  (tq, D) bf16   current q tile
    # wq_ref:  (D, D)  bf16   pre-transposed (in_features, out_features)
    # wkv_ref: (D, 2*hd) bf16 fused, pre-transposed K|V weights
    # wo_ref:  (D, D)  bf16   pre-transposed
    # biases:  (1, D) / (1, 2*hd) f32
    # o_ref:   (tq, D) f32
    # kv_ref:  (S, 2*hd) bf16 VMEM scratch, carried across q tiles of a batch
    qi = pl.program_id(1)

    @pl.when(qi == 0)
    def _():
        # Shared K/V projection for the full sequence, once per batch element.
        kv = jnp.dot(xf_ref[...], wkv_ref[...],
                     preferred_element_type=jnp.float32) + bkv_ref[...]
        kv_ref[...] = kv.astype(kv_ref.dtype)

    # Q projection for this tile; fold the 1/sqrt(hd) scale in f32.
    q = jnp.dot(xq_ref[...], wq_ref[...],
                preferred_element_type=jnp.float32) + bq_ref[...]
    q = (q * scale).astype(jnp.bfloat16)                      # (tq, D)
    tq = q.shape[0]

    kv = kv_ref[...]                                          # (S, 2*hd) bf16
    k = kv[:, :head_dim]                                      # (S, hd)
    v = kv[:, head_dim:]                                      # (S, hd)

    # Stack heads along rows -> one MXU matmul for all heads (shared K).
    q_heads = jnp.concatenate(
        [q[:, h * head_dim:(h + 1) * head_dim] for h in range(n_heads)],
        axis=0)                                               # (H*tq, hd)

    # Scores: contract head_dim without transposing K.
    s = lax.dot_general(q_heads, k, (((1,), (1,)), ((), ())),
                        preferred_element_type=jnp.float32)   # (H*tq, S)

    # Numerically stable softmax in f32; approx reciprocal -> EUP slot.
    m = jnp.max(s, axis=-1, keepdims=True)
    e = jnp.exp(s - m)
    p = e * pl.reciprocal(jnp.sum(e, axis=-1, keepdims=True), approx=True)

    # P @ V for all heads at once (shared V).
    o_heads = jnp.dot(p.astype(jnp.bfloat16), v,
                      preferred_element_type=jnp.float32)     # (H*tq, hd)

    # Re-interleave heads along the feature dim: (tq, D).
    att = jnp.concatenate(
        [o_heads[h * tq:(h + 1) * tq, :] for h in range(n_heads)], axis=-1)

    # Output projection.
    out = jnp.dot(att.astype(jnp.bfloat16), wo_ref[...],
                  preferred_element_type=jnp.float32) + bo_ref[...]
    o_ref[...] = out.astype(o_ref.dtype)


def multi_query_attention(x, params, n_heads: int, *, q_tile: int = 256):
    """x: (B, S, D) float32.  params follow torch.nn.Linear convention:
       wq (D,D), bq (D,), wk (hd,D), bk (hd,), wv (hd,D), bv (hd,),
       wo (D,D), bo (D,)."""
    bs, sl, dim = x.shape
    assert dim % n_heads == 0
    hd = dim // n_heads

    tq = min(q_tile, sl)
    assert sl % tq == 0, "seq_len must be divisible by the q tile"
    nq = sl // tq

    # Pre-transpose + bf16-cast weights (no in-kernel .T, halved DMA bytes).
    wq_t = params["wq"].T.astype(jnp.bfloat16)                 # (D, D)
    wkv_t = jnp.concatenate([params["wk"], params["wv"]],
                            axis=0).T.astype(jnp.bfloat16)     # (D, 2*hd)
    wo_t = params["wo"].T.astype(jnp.bfloat16)                 # (D, D)

    bq = params["bq"].reshape(1, dim).astype(jnp.float32)
    bkv = jnp.concatenate([params["bk"], params["bv"]]).reshape(1, 2 * hd)
    bkv = bkv.astype(jnp.float32)
    bo = params["bo"].reshape(1, dim).astype(jnp.float32)

    x_bf16 = x.astype(jnp.bfloat16)

    kernel = functools.partial(_mqa_kernel, n_heads=n_heads, head_dim=hd,
                               scale=1.0 / math.sqrt(hd))

    const = lambda b, qi: (0, 0)   # weights/biases: resident, never re-fetched

    return pl.pallas_call(
        kernel,
        out_shape=jax.ShapeDtypeStruct((bs, sl, dim), x.dtype),
        grid_spec=pltpu.PrefetchScalarGridSpec(
            num_scalar_prefetch=0,
            grid=(bs, nq),
            in_specs=[
                pl.BlockSpec((None, sl, dim), lambda b, qi: (b, 0, 0)),   # x full
                pl.BlockSpec((None, tq, dim), lambda b, qi: (b, qi, 0)),  # x q-tile
                pl.BlockSpec((dim, dim), const),       # wq^T
                pl.BlockSpec((1, dim), const),         # bq
                pl.BlockSpec((dim, 2 * hd), const),    # [wk|wv]^T fused
                pl.BlockSpec((1, 2 * hd), const),      # [bk|bv] fused
                pl.BlockSpec((dim, dim), const),       # wo^T
                pl.BlockSpec((1, dim), const),         # bo
            ],
            out_specs=pl.BlockSpec((None, tq, dim), lambda b, qi: (b, qi, 0)),
            scratch_shapes=[pltpu.VMEM((sl, 2 * hd), jnp.bfloat16)],
        ),
        compiler_params=pltpu.CompilerParams(
            dimension_semantics=("parallel", "arbitrary"),
            vmem_limit_bytes=32 * 1024 * 1024),
    )(x_bf16, x_bf16, wq_t, bq, wkv_t, bkv, wo_t, bo)


def _reference(x, params, n_heads):
    """Pure-JAX (f32) reference matching the PyTorch multi_query_atnn forward."""
    bs, sl, dim = x.shape
    hd = dim // n_heads
    q = x @ params["wq"].T + params["bq"]                      # (B, S, D)
    k = x @ params["wk"].T + params["bk"]                      # (B, S, hd)
    v = x @ params["wv"].T + params["bv"]                      # (B, S, hd)
    q = q.reshape(bs, sl, n_heads, hd).transpose(0, 2, 1, 3)   # (B, H, S, hd)
    k = k[:, None]                                             # (B, 1, S, hd)
    v = v[:, None]
    attn = (q @ jnp.swapaxes(k, 2, 3)) / math.sqrt(hd)         # (B, H, S, S)
    att = jax.nn.softmax(attn, axis=-1)
    o = att @ v                                                # (B, H, S, hd)
    o = o.transpose(0, 2, 1, 3).reshape(bs, sl, dim)
    return o @ params["wo"].T + params["bo"]


if __name__ == "__main__":
    # Small shapes consistent with the module's forward: (bs, sl, dim)
    bs, sl, dim, n_heads = 2, 8, 32, 4
    hd = dim // n_heads

    key = jax.random.PRNGKey(0)
    keys = jax.random.split(key, 9)

    bound = 1.0 / math.sqrt(dim)
    def _init(k, shape):
        return jax.random.uniform(k, shape, jnp.float32, -bound, bound)

    params = {
        "wq": _init(keys[0], (dim, dim)), "bq": _init(keys[1], (dim,)),
        "wk": _init(keys[2], (hd, dim)),  "bk": _init(keys[3], (hd,)),
        "wv": _init(keys[4], (hd, dim)),  "bv": _init(keys[5], (hd,)),
        "wo": _init(keys[6], (dim, dim)), "bo": _init(keys[7], (dim,)),
    }

    x = jax.random.normal(keys[8], (bs, sl, dim), jnp.float32)

    out = multi_query_attention(x, params, n_heads)
    out = jax.block_until_ready(out)

    ref = _reference(x, params, n_heads)
    assert out.shape == (bs, sl, dim)
    # bf16 MXU operands (f32 accumulation) + approx reciprocal => ~1e-2-level
    # deviations from the pure-f32 reference are expected.
    assert jnp.allclose(out, ref, atol=3e-2, rtol=3e-2), "mismatch vs reference"

    print("KERNEL_OK")
</pallas_src>

<mosaic_0001>
module attributes {stable_mosaic.version = 11 : i64} {
  func.func @_mqa_kernel(%arg0: i32, %arg1: i32, %arg2: memref<1x8x32xbf16, #tpu.memory_space<vmem>>, %arg3: memref<1x8x32xbf16, #tpu.memory_space<vmem>>, %arg4: memref<32x32xbf16, #tpu.memory_space<vmem>>, %arg5: memref<1x32xf32, #tpu.memory_space<vmem>>, %arg6: memref<32x16xbf16, #tpu.memory_space<vmem>>, %arg7: memref<1x16xf32, #tpu.memory_space<vmem>>, %arg8: memref<32x32xbf16, #tpu.memory_space<vmem>>, %arg9: memref<1x32xf32, #tpu.memory_space<vmem>>, %arg10: memref<1x8x32xf32, #tpu.memory_space<vmem>>, %arg11: memref<8x16xbf16, #tpu.memory_space<vmem>>) attributes {dimension_semantics = [#tpu.dimension_semantics<parallel>, #tpu.dimension_semantics<arbitrary>], iteration_bounds = array<i64: 2, 1>, scalar_prefetch = 0 : i64, scratch_operands = 1 : i64, tpu.core_type = #tpu.core_type<tc>, window_params = [{transform_indices = @transform_0, window_bounds = array<i64: 1, 8, 32>}, {transform_indices = @transform_1, window_bounds = array<i64: 1, 8, 32>}, {pipeline_mode = #tpu.pipeline_mode<synchronous>, transform_indices = @transform_2, window_bounds = array<i64: 32, 32>}, {pipeline_mode = #tpu.pipeline_mode<synchronous>, transform_indices = @transform_3, window_bounds = array<i64: 1, 32>}, {pipeline_mode = #tpu.pipeline_mode<synchronous>, transform_indices = @transform_4, window_bounds = array<i64: 32, 16>}, {pipeline_mode = #tpu.pipeline_mode<synchronous>, transform_indices = @transform_5, window_bounds = array<i64: 1, 16>}, {pipeline_mode = #tpu.pipeline_mode<synchronous>, transform_indices = @transform_6, window_bounds = array<i64: 32, 32>}, {pipeline_mode = #tpu.pipeline_mode<synchronous>, transform_indices = @transform_7, window_bounds = array<i64: 1, 32>}, {transform_indices = @transform_8, window_bounds = array<i64: 1, 8, 32>}]} {
    %c0_i32 = arith.constant 0 : i32
    %0 = arith.cmpi eq, %arg1, %c0_i32 : i32
    %1 = arith.extui %0 : i1 to i32
    %c0_i32_0 = arith.constant 0 : i32
    %2 = arith.cmpi ne, %1, %c0_i32_0 : i32
    scf.if %2 {
      %c0_22 = arith.constant 0 : index
      %c0_23 = arith.constant 0 : index
      %c0_24 = arith.constant 0 : index
      %48 = vector.load %arg2[%c0_22, %c0_23, %c0_24] : memref<1x8x32xbf16, #tpu.memory_space<vmem>>, vector<1x8x32xbf16>
      %49 = vector.shape_cast %48 : vector<1x8x32xbf16> to vector<8x32xbf16>
      %c0_25 = arith.constant 0 : index
      %c0_26 = arith.constant 0 : index
      %50 = vector.load %arg6[%c0_25, %c0_26] : memref<32x16xbf16, #tpu.memory_space<vmem>>, vector<32x16xbf16>
      %cst_27 = arith.constant dense<0.000000e+00> : vector<8x16xf32>
      %51 = tpu.matmul %49, %50, %cst_27 {dimension_numbers = #tpu.dot_dimension_numbers<[1], [0], [0], [1], [0, 0, 1, 1], [], []>} : vector<8x32xbf16>, vector<32x16xbf16>, vector<8x16xf32> -> vector<8x16xf32>
      %c0_28 = arith.constant 0 : index
      %c0_29 = arith.constant 0 : index
      %52 = vector.load %arg7[%c0_28, %c0_29] : memref<1x16xf32, #tpu.memory_space<vmem>>, vector<1x16xf32>
      %53 = vector.broadcast %52 : vector<1x16xf32> to vector<8x16xf32>
      %54 = arith.addf %51, %53 : vector<8x16xf32>
      %55 = arith.truncf %54 : vector<8x16xf32> to vector<8x16xbf16>
      %c0_30 = arith.constant 0 : index
      %c0_31 = arith.constant 0 : index
      %56 = vector.load %arg11[%c0_30, %c0_31] : memref<8x16xbf16, #tpu.memory_space<vmem>>, vector<8x16xbf16>
      tpu.vector_store %arg11[%c0_30, %c0_31], %55 {strides = array<i32>} : memref<8x16xbf16, #tpu.memory_space<vmem>>, vector<8x16xbf16>,
    } else {
    }
    %c0 = arith.constant 0 : index
    %c0_1 = arith.constant 0 : index
    %c0_2 = arith.constant 0 : index
    %3 = vector.load %arg3[%c0, %c0_1, %c0_2] : memref<1x8x32xbf16, #tpu.memory_space<vmem>>, vector<1x8x32xbf16>
    %4 = vector.shape_cast %3 : vector<1x8x32xbf16> to vector<8x32xbf16>
    %c0_3 = arith.constant 0 : index
    %c0_4 = arith.constant 0 : index
    %5 = vector.load %arg4[%c0_3, %c0_4] : memref<32x32xbf16, #tpu.memory_space<vmem>>, vector<32x32xbf16>
    %cst = arith.constant dense<0.000000e+00> : vector<8x32xf32>
    %6 = tpu.matmul %4, %5, %cst {dimension_numbers = #tpu.dot_dimension_numbers<[1], [0], [0], [1], [0, 0, 1, 1], [], []>} : vector<8x32xbf16>, vector<32x32xbf16>, vector<8x32xf32> -> vector<8x32xf32>
    %c0_5 = arith.constant 0 : index
    %c0_6 = arith.constant 0 : index
    %7 = vector.load %arg5[%c0_5, %c0_6] : memref<1x32xf32, #tpu.memory_space<vmem>>, vector<1x32xf32>
    %8 = vector.broadcast %7 : vector<1x32xf32> to vector<8x32xf32>
    %9 = arith.addf %6, %8 : vector<8x32xf32>
    %cst_7 = arith.constant 0.353553385 : f32
    %10 = vector.broadcast %cst_7 : f32 to vector<8x32xf32>
    %11 = arith.mulf %9, %10 : vector<8x32xf32>
    %12 = arith.truncf %11 : vector<8x32xf32> to vector<8x32xbf16>
    %c0_8 = arith.constant 0 : index
    %c0_9 = arith.constant 0 : index
    %13 = vector.load %arg11[%c0_8, %c0_9] : memref<8x16xbf16, #tpu.memory_space<vmem>>, vector<8x16xbf16>
    %14 = vector.extract_strided_slice %13 {offsets = [0, 0], sizes = [8, 8], strides = [1, 1]} : vector<8x16xbf16> to vector<8x8xbf16>
    %15 = vector.extract_strided_slice %13 {offsets = [0, 8], sizes = [8, 8], strides = [1, 1]} : vector<8x16xbf16> to vector<8x8xbf16>
    %16 = vector.extract_strided_slice %12 {offsets = [0, 0], sizes = [8, 8], strides = [1, 1]} : vector<8x32xbf16> to vector<8x8xbf16>
    %17 = vector.extract_strided_slice %12 {offsets = [0, 8], sizes = [8, 8], strides = [1, 1]} : vector<8x32xbf16> to vector<8x8xbf16>
    %18 = vector.extract_strided_slice %12 {offsets = [0, 16], sizes = [8, 8], strides = [1, 1]} : vector<8x32xbf16> to vector<8x8xbf16>
    %19 = vector.extract_strided_slice %12 {offsets = [0, 24], sizes = [8, 8], strides = [1, 1]} : vector<8x32xbf16> to vector<8x8xbf16>
    %20 = tpu.concatenate %16, %17, %18, %19 in 0 : vector<8x8xbf16>, vector<8x8xbf16>, vector<8x8xbf16>, vector<8x8xbf16> -> vector<32x8xbf16>
    %cst_10 = arith.constant dense<0.000000e+00> : vector<32x8xf32>
    %21 = tpu.matmul %20, %14, %cst_10 {dimension_numbers = #tpu.dot_dimension_numbers<[1], [1], [0], [0], [0, 0, 1, 0], [], []>} : vector<32x8xbf16>, vector<8x8xbf16>, vector<32x8xf32> -> vector<32x8xf32>
    %cst_11 = arith.constant dense<0xFF800000> : vector<32xf32>
    %22 = vector.multi_reduction <maximumf>, %21, %cst_11 [1] : vector<32x8xf32> to vector<32xf32>
    %23 = vector.shape_cast %22 : vector<32xf32> to vector<32x1xf32>
    %24 = vector.broadcast %23 : vector<32x1xf32> to vector<32x8xf32>
    %25 = arith.subf %21, %24 : vector<32x8xf32>
    %26 = math.exp %25 : vector<32x8xf32>
    %cst_12 = arith.constant dense<0.000000e+00> : vector<32xf32>
    %27 = vector.multi_reduction <add>, %26, %cst_12 [1] : vector<32x8xf32> to vector<32xf32>
    %28 = vector.shape_cast %27 : vector<32xf32> to vector<32x1xf32>
    %29 = tpu.reciprocal %28 {approx = true} : vector<32x1xf32> -> vector<32x1xf32>
    %30 = vector.broadcast %29 : vector<32x1xf32> to vector<32x8xf32>
    %31 = arith.mulf %26, %30 : vector<32x8xf32>
    %32 = arith.truncf %31 : vector<32x8xf32> to vector<32x8xbf16>
    %cst_13 = arith.constant dense<0.000000e+00> : vector<32x8xf32>
    %33 = tpu.matmul %32, %15, %cst_13 {dimension_numbers = #tpu.dot_dimension_numbers<[1], [0], [0], [1], [0, 0, 1, 1], [], []>} : vector<32x8xbf16>, vector<8x8xbf16>, vector<32x8xf32> -> vector<32x8xf32>
    %34 = vector.extract_strided_slice %33 {offsets = [0, 0], sizes = [8, 8], strides = [1, 1]} : vector<32x8xf32> to vector<8x8xf32>
    %35 = vector.extract_strided_slice %33 {offsets = [8, 0], sizes = [8, 8], strides = [1, 1]} : vector<32x8xf32> to vector<8x8xf32>
    %36 = vector.extract_strided_slice %33 {offsets = [16, 0], sizes = [8, 8], strides = [1, 1]} : vector<32x8xf32> to vector<8x8xf32>
    %37 = vector.extract_strided_slice %33 {offsets = [24, 0], sizes = [8, 8], strides = [1, 1]} : vector<32x8xf32> to vector<8x8xf32>
    %38 = tpu.concatenate %34, %35, %36, %37 in 1 : vector<8x8xf32>, vector<8x8xf32>, vector<8x8xf32>, vector<8x8xf32> -> vector<8x32xf32>
    %39 = arith.truncf %38 : vector<8x32xf32> to vector<8x32xbf16>
    %c0_14 = arith.constant 0 : index
    %c0_15 = arith.constant 0 : index
    %40 = vector.load %arg8[%c0_14, %c0_15] : memref<32x32xbf16, #tpu.memory_space<vmem>>, vector<32x32xbf16>
    %cst_16 = arith.constant dense<0.000000e+00> : vector<8x32xf32>
    %41 = tpu.matmul %39, %40, %cst_16 {dimension_numbers = #tpu.dot_dimension_numbers<[1], [0], [0], [1], [0, 0, 1, 1], [], []>} : vector<8x32xbf16>, vector<32x32xbf16>, vector<8x32xf32> -> vector<8x32xf32>
    %c0_17 = arith.constant 0 : index
    %c0_18 = arith.constant 0 : index
    %42 = vector.load %arg9[%c0_17, %c0_18] : memref<1x32xf32, #tpu.memory_space<vmem>>, vector<1x32xf32>
    %43 = vector.broadcast %42 : vector<1x32xf32> to vector<8x32xf32>
    %44 = arith.addf %41, %43 : vector<8x32xf32>
    %c0_19 = arith.constant 0 : index
    %c0_20 = arith.constant 0 : index
    %c0_21 = arith.constant 0 : index
    %45 = vector.load %arg10[%c0_19, %c0_20, %c0_21] : memref<1x8x32xf32, #tpu.memory_space<vmem>>, vector<1x8x32xf32>
    %46 = vector.shape_cast %45 : vector<1x8x32xf32> to vector<8x32xf32>
    %47 = vector.shape_cast %44 : vector<8x32xf32> to vector<1x8x32xf32>
    tpu.vector_store %arg10[%c0_19, %c0_20, %c0_21], %47 {strides = array<i32>} : memref<1x8x32xf32, #tpu.memory_space<vmem>>, vector<1x8x32xf32>,
    return
  }
  func.func @transform_0(%arg0: i32, %arg1: i32) -> (i32, i32, i32) {
    %c0_i32 = arith.constant 0 : i32
    %c0_i32_0 = arith.constant 0 : i32
    %c0_i32_1 = arith.constant 0 : i32
    return %arg0, %c0_i32, %c0_i32_0 : i32, i32, i32
  }
  func.func @transform_1(%arg0: i32, %arg1: i32) -> (i32, i32, i32) {
    %c0_i32 = arith.constant 0 : i32
    %c0_i32_0 = arith.constant 0 : i32
    return %arg0, %arg1, %c0_i32 : i32, i32, i32
  }
  func.func @transform_2(%arg0: i32, %arg1: i32) -> (i32, i32) {
    %c0_i32 = arith.constant 0 : i32
    %c0_i32_0 = arith.constant 0 : i32
    %c0_i32_1 = arith.constant 0 : i32
    return %c0_i32, %c0_i32_0 : i32, i32
  }
  func.func @transform_3(%arg0: i32, %arg1: i32) -> (i32, i32) {
    %c0_i32 = arith.constant 0 : i32
    %c0_i32_0 = arith.constant 0 : i32
    %c0_i32_1 = arith.constant 0 : i32
    return %c0_i32, %c0_i32_0 : i32, i32
  }
  func.func @transform_4(%arg0: i32, %arg1: i32) -> (i32, i32) {
    %c0_i32 = arith.constant 0 : i32
    %c0_i32_0 = arith.constant 0 : i32
    %c0_i32_1 = arith.constant 0 : i32
    return %c0_i32, %c0_i32_0 : i32, i32
  }
  func.func @transform_5(%arg0: i32, %arg1: i32) -> (i32, i32) {
    %c0_i32 = arith.constant 0 : i32
    %c0_i32_0 = arith.constant 0 : i32
    %c0_i32_1 = arith.constant 0 : i32
    return %c0_i32, %c0_i32_0 : i32, i32
  }
  func.func @transform_6(%arg0: i32, %arg1: i32) -> (i32, i32) {
    %c0_i32 = arith.constant 0 : i32
    %c0_i32_0 = arith.constant 0 : i32
    %c0_i32_1 = arith.constant 0 : i32
    return %c0_i32, %c0_i32_0 : i32, i32
  }
  func.func @transform_7(%arg0: i32, %arg1: i32) -> (i32, i32) {
    %c0_i32 = arith.constant 0 : i32
    %c0_i32_0 = arith.constant 0 : i32
    %c0_i32_1 = arith.constant 0 : i32
    return %c0_i32, %c0_i32_0 : i32, i32
  }
  func.func @transform_8(%arg0: i32, %arg1: i32) -> (i32, i32, i32) {
    %c0_i32 = arith.constant 0 : i32
    %c0_i32_0 = arith.constant 0 : i32
    return %arg0, %arg1, %c0_i32 : i32, i32, i32
  }
}

</mosaic_0001>

<llo_original>
// kernel: tpu_custom_call.1
$region0: #{tpu_custom_call.1}
  #allocation0 [shape = 'u32[]', space=smem, size = 0x4, offset = 0x4, fixed_abs, tag = 'smem constant byte address 0x4 - core index']
  #allocation1 [shape = 'u32[144,128]{1,0:T(1,128)}', space=vmem, size = 0x12000, scoped, tag = 'internal scratch']
  #allocation2 [shape = 'bf16[8,16]{1,0:T(8,128)(2,1)}', space=vmem, size = 0x800, scoped, tag = 'scratch operand']
  %s0 = inlined_call_operand.hbm [shape: bf16[2,8,32], index: 0, kind: input, shape index: {}]
  %s1 = inlined_call_operand.hbm [shape: bf16[2,8,32], index: 1, kind: input, shape index: {}]
  %s2 = inlined_call_operand.vmem [shape: bf16[32,32], index: 2, kind: input, shape index: {}]
  %s3 = inlined_call_operand.vmem [shape: f32[1,32], index: 3, kind: input, shape index: {}]
  %s4 = inlined_call_operand.vmem [shape: bf16[32,16], index: 4, kind: input, shape index: {}]
  %s5 = inlined_call_operand.vmem [shape: f32[1,16], index: 5, kind: input, shape index: {}]
  %s6 = inlined_call_operand.vmem [shape: bf16[32,32], index: 6, kind: input, shape index: {}]
  %s7 = inlined_call_operand.vmem [shape: f32[1,32], index: 7, kind: input, shape index: {}]
  %s8 = inlined_call_operand.hbm [shape: f32[2,8,32], index: 8, kind: output, shape index: {}]
  %s9 = sld [smem:[#allocation0]]
  $region77: #{tpu_custom_call.1} parent=0
    _
  %s11 = ssub.s32 1, %s9
  %s12 = scalar_select 0, %s11, %s9
  $region1: #{tpu_custom_call.1} parent=0
    #allocation3 [shape = 'u8[4096]{0}', space=vmem, size = 0x1000, scoped, tag = 'input window, operand 0']
    #allocation4 [shape = 's32[2]{0}', space=sflag, size = 0x8, scoped, tag = 'scoped memory for tpu_custom_call.1']
    #allocation5 [shape = 's32[2]{0}', space=sflag, size = 0x8, scoped, tag = 'scoped memory for tpu_custom_call.1']
    #allocation6 [shape = 'u8[4096]{0}', space=vmem, size = 0x1000, scoped, tag = 'input window, operand 1']
    #allocation7 [shape = 's32[2]{0}', space=sflag, size = 0x8, scoped, tag = 'scoped memory for tpu_custom_call.1']
    #allocation8 [shape = 'u8[8192]{0}', space=vmem, size = 0x2000, scoped, tag = 'output window, operand 0']
    %13 = vsyncpa [#allocation4], 0
    %s14 = scalar_lea.sflag [#allocation4], 1
    %15 = vsyncpa %s14, 0
    %16 = vsyncpa [#allocation7], 0
    %s17 = scalar_lea.sflag [#allocation7], 1
    %18 = vsyncpa %s17, 0
    %19 = vsyncpa [#allocation5], 0
    %s20 = scalar_lea.sflag [#allocation5], 1
    %21 = vsyncpa %s20, 0
    loop: start=0, step=1, limit=4
    $region2: #{tpu_custom_call.1} parent=1 // loop_pre_header
      _
    $region3: #{tpu_custom_call.1} parent=1 // loop_header
      %s23 = sphi 0, %s27
      %p24 = scmp.ge.s32.totalorder %s23, 4
      %s30 = sphi 0, %s42
      %s31 = sphi 0, %s38
      %s32 = sphi 0, %s30
      %s33 = sphi 0, %s31
      %s34 = sphi 0, %s32
      %s35 = sphi 0, %s33
      %s45 = sphi 0, %s47
      %s48 = sphi 0, %s45
      %s49 = sphi 0, %s48
      %s65 = sphi 0, %s49
      %s73 = sphi 0, %s75
      %s76 = sphi 0, %s73
      %s77 = sphi 0, %s76
      %s93 = sphi 0, %s77
      %s97 = sphi 0, %s97
      %s99 = sphi 0, %s97
      %s100 = sphi 0, %s99
      %s114 = sphi 0, %s100
      %s118 = sphi 0, %s118
      %s120 = sphi 0, %s118
      %s121 = sphi 0, %s120
      %s135 = sphi 0, %s121
      %s139 = sphi 0, %s139
      %s141 = sphi 0, %s139
      %s142 = sphi 0, %s141
      %s156 = sphi 0, %s142
      %s160 = sphi 0, %s160
      %s162 = sphi 0, %s160
      %s163 = sphi 0, %s162
      %s177 = sphi 0, %s163
      %s181 = sphi 0, %s181
      %s183 = sphi 0, %s181
      %s184 = sphi 0, %s183
      %s198 = sphi 0, %s184
      %s202 = sphi 0, %s202
      %s204 = sphi 0, %s202
      %s205 = sphi 0, %s204
      %s219 = sphi 0, %s205
      %s227 = sphi 0, %s229
      %s230 = sphi 0, %s227
      %s231 = sphi 0, %s230
      %s247 = sphi 0, %s231
    $region4: #{tpu_custom_call.1} parent=1 // loop_header_branch
      %26 = sbr.rel (%p24) target = $region8
    $region5: #{tpu_custom_call.1} parent=1 // loop_body
      %s28 = ssub.s32 %s23, 1
      %s29 = ssub.s32 %s23, 2
      %s36 = sadd.s32 1, %s31
      %p37 = scmp.ge.s32.totalorder %s36, 1
      %s38 = scalar_select %p37, 0, %s36
      %s39 = sadd.s32 1, %s30
      %s40 = scalar_select %p37, %s39, %s30
      %p41 = scmp.ge.s32.totalorder %s40, 2
      %s42 = scalar_select %p41, 0, %s40
      %s43 = ssub.s32 %s30, %s42
      %p44 = scmp.eq.s32.totalorder %s43, 0
      %s46 = sadd.s32 %s45, 1
      %s47 = scalar_select %p44, %s45, %s46
      %p50 = pneg %p44
      %p51 = scmp.eq.s32.totalorder %s23, 1
      %p52 = por %p50, %p51
      %p53 = scmp.ne.s32.totalorder %s45, %s48
      %p54 = scmp.eq.s32.totalorder %s23, 0
      %p55 = por %p53, %p54
      %p56 = scmp.ne.s32.totalorder %s45, %s48
      %p57 = scmp.eq.s32.totalorder %s28, 1
      %p58 = por %p56, %p57
      %p59 = scmp.ne.s32.totalorder %s48, %s49
      %p60 = scmp.eq.s32.totalorder %s28, 0
      %p61 = por %p59, %p60
      %p62 = scmp.ne.s32.totalorder %s48, %s49
      %p63 = scmp.eq.s32.totalorder %s29, 1
      %p64 = por %p62, %p63
      %p66 = scmp.ne.s32.totalorder %s49, %s65
      %p67 = scmp.eq.s32.totalorder %s29, 0
      %p68 = por %p66, %p67
      %s69 = ssub.s32 %s30, %s42
      %s70 = ssub.s32 %s31, %s38
      %s71 = sor.u32 %s69, %s70
      %p72 = scmp.eq.s32.totalorder %s71, 0
      %s74 = sadd.s32 %s73, 1
      %s75 = scalar_select %p72, %s73, %s74
      %p78 = pneg %p72
      %p79 = scmp.eq.s32.totalorder %s23, 1
      %p80 = por %p78, %p79
      %p81 = scmp.ne.s32.totalorder %s73, %s76
      %p82 = scmp.eq.s32.totalorder %s23, 0
      %p83 = por %p81, %p82
      %p84 = scmp.ne.s32.totalorder %s73, %s76
      %p85 = scmp.eq.s32.totalorder %s28, 1
      %p86 = por %p84, %p85
      %p87 = scmp.ne.s32.totalorder %s76, %s77
      %p88 = scmp.eq.s32.totalorder %s28, 0
      %p89 = por %p87, %p88
      %p90 = scmp.ne.s32.totalorder %s76, %s77
      %p91 = scmp.eq.s32.totalorder %s29, 1
      %p92 = por %p90, %p91
      %p94 = scmp.ne.s32.totalorder %s77, %s93
      %p95 = scmp.eq.s32.totalorder %s29, 0
      %p96 = por %p94, %p95
      %s98 = sadd.s32 %s97, 1
      %p101 = scmp.eq.s32.totalorder %s23, 1
      %p102 = scmp.ne.s32.totalorder %s97, %s99
      %p103 = scmp.eq.s32.totalorder %s23, 0
      %p104 = por %p102, %p103
      %p105 = scmp.ne.s32.totalorder %s97, %s99
      %p106 = scmp.eq.s32.totalorder %s28, 1
      %p107 = por %p105, %p106
      %p108 = scmp.ne.s32.totalorder %s99, %s100
      %p109 = scmp.eq.s32.totalorder %s28, 0
      %p110 = por %p108, %p109
      %p111 = scmp.ne.s32.totalorder %s99, %s100
      %p112 = scmp.eq.s32.totalorder %s29, 1
      %p113 = por %p111, %p112
      %p115 = scmp.ne.s32.totalorder %s100, %s114
      %p116 = scmp.eq.s32.totalorder %s29, 0
      %p117 = por %p115, %p116
      %s119 = sadd.s32 %s118, 1
      %p122 = scmp.eq.s32.totalorder %s23, 1
      %p123 = scmp.ne.s32.totalorder %s118, %s120
      %p124 = scmp.eq.s32.totalorder %s23, 0
      %p125 = por %p123, %p124
      %p126 = scmp.ne.s32.totalorder %s118, %s120
      %p127 = scmp.eq.s32.totalorder %s28, 1
      %p128 = por %p126, %p127
      %p129 = scmp.ne.s32.totalorder %s120, %s121
      %p130 = scmp.eq.s32.totalorder %s28, 0
      %p131 = por %p129, %p130
      %p132 = scmp.ne.s32.totalorder %s120, %s121
      %p133 = scmp.eq.s32.totalorder %s29, 1
      %p134 = por %p132, %p133
      %p136 = scmp.ne.s32.totalorder %s121, %s135
      %p137 = scmp.eq.s32.totalorder %s29, 0
      %p138 = por %p136, %p137
      %s140 = sadd.s32 %s139, 1
      %p143 = scmp.eq.s32.totalorder %s23, 1
      %p144 = scmp.ne.s32.totalorder %s139, %s141
      %p145 = scmp.eq.s32.totalorder %s23, 0
      %p146 = por %p144, %p145
      %p147 = scmp.ne.s32.totalorder %s139, %s141
      %p148 = scmp.eq.s32.totalorder %s28, 1
      %p149 = por %p147, %p148
      %p150 = scmp.ne.s32.totalorder %s141, %s142
      %p151 = scmp.eq.s32.totalorder %s28, 0
      %p152 = por %p150, %p151
      %p153 = scmp.ne.s32.totalorder %s141, %s142
      %p154 = scmp.eq.s32.totalorder %s29, 1
      %p155 = por %p153, %p154
      %p157 = scmp.ne.s32.totalorder %s142, %s156
      %p158 = scmp.eq.s32.totalorder %s29, 0
      %p159 = por %p157, %p158
      %s161 = sadd.s32 %s160, 1
      %p164 = scmp.eq.s32.totalorder %s23, 1
      %p165 = scmp.ne.s32.totalorder %s160, %s162
      %p166 = scmp.eq.s32.totalorder %s23, 0
      %p167 = por %p165, %p166
      %p168 = scmp.ne.s32.totalorder %s160, %s162
      %p169 = scmp.eq.s32.totalorder %s28, 1
      %p170 = por %p168, %p169
      %p171 = scmp.ne.s32.totalorder %s162, %s163
      %p172 = scmp.eq.s32.totalorder %s28, 0
      %p173 = por %p171, %p172
      %p174 = scmp.ne.s32.totalorder %s162, %s163
      %p175 = scmp.eq.s32.totalorder %s29, 1
      %p176 = por %p174, %p175
      %p178 = scmp.ne.s32.totalorder %s163, %s177
      %p179 = scmp.eq.s32.totalorder %s29, 0
      %p180 = por %p178, %p179
      %s182 = sadd.s32 %s181, 1
      %p185 = scmp.eq.s32.totalorder %s23, 1
      %p186 = scmp.ne.s32.totalorder %s181, %s183
      %p187 = scmp.eq.s32.totalorder %s23, 0
      %p188 = por %p186, %p187
      %p189 = scmp.ne.s32.totalorder %s181, %s183
      %p190 = scmp.eq.s32.totalorder %s28, 1
      %p191 = por %p189, %p190
      %p192 = scmp.ne.s32.totalorder %s183, %s184
      %p193 = scmp.eq.s32.totalorder %s28, 0
      %p194 = por %p192, %p193
      %p195 = scmp.ne.s32.totalorder %s183, %s184
      %p196 = scmp.eq.s32.totalorder %s29, 1
      %p197 = por %p195, %p196
      %p199 = scmp.ne.s32.totalorder %s184, %s198
      %p200 = scmp.eq.s32.totalorder %s29, 0
      %p201 = por %p199, %p200
      %s203 = sadd.s32 %s202, 1
      %p206 = scmp.eq.s32.totalorder %s23, 1
      %p207 = scmp.ne.s32.totalorder %s202, %s204
      %p208 = scmp.eq.s32.totalorder %s23, 0
      %p209 = por %p207, %p208
      %p210 = scmp.ne.s32.totalorder %s202, %s204
      %p211 = scmp.eq.s32.totalorder %s28, 1
      %p212 = por %p210, %p211
      %p213 = scmp.ne.s32.totalorder %s204, %s205
      %p214 = scmp.eq.s32.totalorder %s28, 0
      %p215 = por %p213, %p214
      %p216 = scmp.ne.s32.totalorder %s204, %s205
      %p217 = scmp.eq.s32.totalorder %s29, 1
      %p218 = por %p216, %p217
      %p220 = scmp.ne.s32.totalorder %s205, %s219
      %p221 = scmp.eq.s32.totalorder %s29, 0
      %p222 = por %p220, %p221
      %s223 = ssub.s32 %s30, %s42
      %s224 = ssub.s32 %s31, %s38
      %s225 = sor.u32 %s223, %s224
      %p226 = scmp.eq.s32.totalorder %s225, 0
      %s228 = sadd.s32 %s227, 1
      %s229 = scalar_select %p226, %s227, %s228
      %p232 = pneg %p226
      %p233 = scmp.eq.s32.totalorder %s23, 1
      %p234 = por %p232, %p233
      %p235 = scmp.ne.s32.totalorder %s227, %s230
      %p236 = scmp.eq.s32.totalorder %s23, 0
      %p237 = por %p235, %p236
      %p238 = scmp.ne.s32.totalorder %s227, %s230
      %p239 = scmp.eq.s32.totalorder %s28, 1
      %p240 = por %p238, %p239
      %p241 = scmp.ne.s32.totalorder %s230, %s231
      %p242 = scmp.eq.s32.totalorder %s28, 0
      %p243 = por %p241, %p242
      %p244 = scmp.ne.s32.totalorder %s230, %s231
      %p245 = scmp.eq.s32.totalorder %s29, 1
      %p246 = por %p244, %p245
      %p248 = scmp.ne.s32.totalorder %s231, %s247
      %p249 = scmp.eq.s32.totalorder %s29, 0
      %p250 = por %p248, %p249
      %p251 = scmp.le.s32.totalorder 1, %s23
      %p252 = scmp.lt.s32.totalorder %s23, 3
      %p253 = pnand %p251, %p252
      %p254 = pneg %p253
      // Predicated region
      $region9: #{tpu_custom_call.1} parent=5 // pred_check
        _
      $region10: #{tpu_custom_call.1} parent=5 // pred_check_branch
        %256 = sbr.rel (%p253) target = $region12
      $region11: #{tpu_custom_call.1} parent=5 // pred_region
        %s257 = ssub.s32 %s23, 1
        // Predicated region
        $region13: #{tpu_custom_call.1} parent=11 // pred_check
          %p258 = pneg %p110
        $region14: #{tpu_custom_call.1} parent=11 // pred_check_branch
          %260 = sbr.rel (%p258) target = $region16
        $region15: #{tpu_custom_call.1} parent=11 // pred_region
          _
        $region16: #{tpu_custom_call.1} parent=11 // pred_fallthru
          _
        // Predicated region
        $region17: #{tpu_custom_call.1} parent=11 // pred_check
          %p261 = pneg %p131
        $region18: #{tpu_custom_call.1} parent=11 // pred_check_branch
          %263 = sbr.rel (%p261) target = $region20
        $region19: #{tpu_custom_call.1} parent=11 // pred_region
          _
        $region20: #{tpu_custom_call.1} parent=11 // pred_fallthru
          _
        // Predicated region
        $region21: #{tpu_custom_call.1} parent=11 // pred_check
          %p264 = pneg %p152
        $region22: #{tpu_custom_call.1} parent=11 // pred_check_branch
          %266 = sbr.rel (%p264) target = $region24
        $region23: #{tpu_custom_call.1} parent=11 // pred_region
          _
        $region24: #{tpu_custom_call.1} parent=11 // pred_fallthru
          _
        // Predicated region
        $region25: #{tpu_custom_call.1} parent=11 // pred_check
          %p267 = pneg %p173
        $region26: #{tpu_custom_call.1} parent=11 // pred_check_branch
          %269 = sbr.rel (%p267) target = $region28
        $region27: #{tpu_custom_call.1} parent=11 // pred_region
          _
        $region28: #{tpu_custom_call.1} parent=11 // pred_fallthru
          _
        // Predicated region
        $region29: #{tpu_custom_call.1} parent=11 // pred_check
          %p270 = pneg %p194
        $region30: #{tpu_custom_call.1} parent=11 // pred_check_branch
          %272 = sbr.rel (%p270) target = $region32
        $region31: #{tpu_custom_call.1} parent=11 // pred_region
          _
        $region32: #{tpu_custom_call.1} parent=11 // pred_fallthru
          _
        // Predicated region
        $region33: #{tpu_custom_call.1} parent=11 // pred_check
          %p273 = pneg %p215
        $region34: #{tpu_custom_call.1} parent=11 // pred_check_branch
          %275 = sbr.rel (%p273) target = $region36
        $region35: #{tpu_custom_call.1} parent=11 // pred_region
          _
        $region36: #{tpu_custom_call.1} parent=11 // pred_fallthru
          _
      $region12: #{tpu_custom_call.1} parent=5 // pred_fallthru
        _
      %p276 = scmp.lt.s32.totalorder %s23, 2
      // Predicated region
      $region37: #{tpu_custom_call.1} parent=5 // pred_check
        %p277 = pneg %p276
      $region38: #{tpu_custom_call.1} parent=5 // pred_check_branch
        %279 = sbr.rel (%p277) target = $region40
      $region39: #{tpu_custom_call.1} parent=5 // pred_region
        // Predicated region
        $region41: #{tpu_custom_call.1} parent=39 // pred_check
          %p280 = pneg %p55
        $region42: #{tpu_custom_call.1} parent=39 // pred_check_branch
          %282 = sbr.rel (%p280) target = $region44
        $region43: #{tpu_custom_call.1} parent=39 // pred_region
          %s283 = sand.u32 %s45, 1
          %s284 = scalar_lea.sflag [#allocation4], %s283
          %s285 = sand.u32 %s45, 1
          %s286 = smul.addr %s285, 4
          %s287 = scalar_lea.vmem [#allocation3], %s286
          %s289 = ssub.s32 64, 64
          %290 = vsyncadd %s284, %s289
          %s291 = smul.addr %s30, 64
          %s292 = scalar_lea.hbm %s0, %s291
          %s294 = sshll.u32 %s287, 4
          %s295 = int_to_ptr.vmem [resolvable:$true] %s294
          %297 = dma.hbm_to_vmem [thread:$0]  %s292, 64, %s295, %s284
        $region44: #{tpu_custom_call.1} parent=39 // pred_fallthru
          _
        // Predicated region
        $region45: #{tpu_custom_call.1} parent=39 // pred_check
          %p298 = pneg %p83
        $region46: #{tpu_custom_call.1} parent=39 // pred_check_branch
          %300 = sbr.rel (%p298) target = $region48
        $region47: #{tpu_custom_call.1} parent=39 // pred_region
          %s301 = sand.u32 %s73, 1
          %s302 = scalar_lea.sflag [#allocation7], %s301
          %s303 = sand.u32 %s73, 1
          %s304 = smul.addr %s303, 4
          %s305 = scalar_lea.vmem [#allocation6], %s304
          %s307 = ssub.s32 64, 64
          %308 = vsyncadd %s302, %s307
          %s309 = sadd.s32 %s31, %s30
          %s310 = smul.addr %s309, 64
          %s311 = scalar_lea.hbm %s1, %s310
          %s313 = sshll.u32 %s305, 4
          %s314 = int_to_ptr.vmem [resolvable:$true] %s313
          %316 = dma.hbm_to_vmem [thread:$0]  %s311, 64, %s314, %s302
        $region48: #{tpu_custom_call.1} parent=39 // pred_fallthru
          _
      $region40: #{tpu_custom_call.1} parent=5 // pred_fallthru
        _
      %p317 = scmp.le.s32.totalorder 1, %s23
      %p318 = scmp.lt.s32.totalorder %s23, 3
      %p319 = pnand %p317, %p318
      %p320 = pneg %p319
      // Predicated region
      $region49: #{tpu_custom_call.1} parent=5 // pred_check
        _
      $region50: #{tpu_custom_call.1} parent=5 // pred_check_branch
        %322 = sbr.rel (%p319) target = $region52
      $region51: #{tpu_custom_call.1} parent=5 // pred_region
        %s323 = ssub.s32 %s23, 1
        %s324 = sand.u32 %s48, 1
        %s325 = scalar_lea.sflag [#allocation4], %s324
        %s326 = sand.u32 %s48, 1
        %s327 = smul.addr %s326, 4
        %s328 = scalar_lea.vmem [#allocation3], %s327
        // Predicated region
        $region53: #{tpu_custom_call.1} parent=51 // pred_check
          %p329 = pneg %p61
        $region54: #{tpu_custom_call.1} parent=51 // pred_check_branch
          %331 = sbr.rel (%p329) target = $region56
        $region55: #{tpu_custom_call.1} parent=51 // pred_region
          %332 = dma.done %s325, 64
        $region56: #{tpu_custom_call.1} parent=51 // pred_fallthru
          _
        %s333 = sand.u32 %s76, 1
        %s334 = scalar_lea.sflag [#allocation7], %s333
        %s335 = sand.u32 %s76, 1
        %s336 = smul.addr %s335, 4
        %s337 = scalar_lea.vmem [#allocation6], %s336
        // Predicated region
        $region57: #{tpu_custom_call.1} parent=51 // pred_check
          %p338 = pneg %p89
        $region58: #{tpu_custom_call.1} parent=51 // pred_check_branch
          %340 = sbr.rel (%p338) target = $region60
        $region59: #{tpu_custom_call.1} parent=51 // pred_region
          %341 = dma.done %s334, 64
        $region60: #{tpu_custom_call.1} parent=51 // pred_fallthru
          _
        %s342 = sand.u32 %s48, 1
        %s343 = scalar_lea.sflag [#allocation4], %s342
        %s344 = sand.u32 %s48, 1
        %s345 = smul.addr %s344, 4
        %s346 = scalar_lea.vmem [#allocation3], %s345
        %p347 = pneg %p61
        %p348 = pneg %p58
        %s349 = sand.u32 %s76, 1
        %s350 = scalar_lea.sflag [#allocation7], %s349
        %s351 = sand.u32 %s76, 1
        %s352 = smul.addr %s351, 4
        %s353 = scalar_lea.vmem [#allocation6], %s352
        %p354 = pneg %p89
        %p355 = pneg %p86
        %p356 = pneg %p110
        %p357 = pneg %p107
        %p358 = pneg %p131
        %p359 = pneg %p128
        %p360 = pneg %p152
        %p361 = pneg %p149
        %p362 = pneg %p173
        %p363 = pneg %p170
        %p364 = pneg %p194
        %p365 = pneg %p191
        %p366 = pneg %p215
        %p367 = pneg %p212
        %p368 = pneg %p243
        %p369 = pneg %p240
        %s370 = sand.u32 %s230, 1
        %s371 = scalar_lea.sflag [#allocation5], %s370
        %s372 = sand.u32 %s230, 1
        %s373 = smul.addr %s372, 8
        %s374 = scalar_lea.vmem [#allocation8], %s373
        %p376 = scmp.eq.s32.totalorder %s33, 0
        // Predicated region
        $region61: #{tpu_custom_call.1} parent=51 // pred_check
          %p377 = pneg %p376
        $region62: #{tpu_custom_call.1} parent=51 // pred_check_branch
          %379 = sbr.rel (%p377) target = $region64
        $region63: #{tpu_custom_call.1} parent=51 // pred_region
          %v380 = vld [vmem:[%s328] sm:$0xf]
          %v381 = vld [vmem:[%s4] sm:$0xf]
          %v382 = vld [vmem:[%s4 + $0x4] sm:$0xf]
          %v383 = vld [vmem:[%s4 + $0x8] sm:$0xf]
          %v384 = vld [vmem:[%s4 + $0xc] sm:$0xf]
          %v385 = vld [vmem:[%s5] sm:$0x1]
          %v387 = vlaneseq
          %v388 = vshrl.u32 %v387, 7
          %v389 = vsub.s32 0, %v388
          %v390 = vrot.slane %v385, %v389
          %v396 = vunpack.c.l.b16 %v381
          %v397 = vunpack.c.l.b16 %v382
          %v398 = vunpack.c.l.b16 %v383
          %v399 = vunpack.c.l.b16 %v384
          %v400 = vpack.c.b16 %v397, %v396
          %v401 = vpack.c.b16 %v399, %v398
          %vm404 = vcmask 261120
          %v406 = vsel %vm404, %v380, 0
          %408 = vmatprep.subr.bf16.mxu0 0
          %409 = vmatpush1.bf16.msra.mxu0 %v400
          %410 = vmatprep.subr.bf16.mxu0 0
          %411 = vmatpush1.bf16.msra.mxu0 %v401
          %412 = vmatprep.subr.bf16.mxu0 0
          %413 = vmatpush1.bf16.msra.mxu0 0
          %414 = vmatprep.subr.bf16.mxu0 0
          %415 = vmatpush1.bf16.msra.mxu0 0
          %416 = vmatprep.subr.bf16.mxu0 0
          %417 = vmatpush1.bf16.msra.mxu0 0
          %418 = vmatprep.subr.bf16.mxu0 0
          %419 = vmatpush1.bf16.msra.mxu0 0
          %420 = vmatprep.subr.bf16.mxu0 0
          %421 = vmatpush1.bf16.msra.mxu0 0
          %422 = vmatprep.subr.bf16.mxu0 0
          %423 = vmatpush1.bf16.msra.mxu0 0
          %424 = vmatprep.subr.bf16.mxu0 0
          %425 = vmatpush1.bf16.msra.mxu0 0
          %426 = vmatprep.subr.bf16.mxu0 0
          %427 = vmatpush1.bf16.msra.mxu0 0
          %428 = vmatprep.subr.bf16.mxu0 0
          %429 = vmatpush1.bf16.msra.mxu0 0
          %430 = vmatprep.subr.bf16.mxu0 0
          %431 = vmatpush1.bf16.msra.mxu0 0
          %432 = vmatprep.subr.bf16.mxu0 0
          %433 = vmatpush1.bf16.msra.mxu0 0
          %434 = vmatprep.subr.bf16.mxu0 0
          %435 = vmatpush1.bf16.msra.mxu0 0
          %436 = vmatprep.subr.bf16.mxu0 0
          %437 = vmatpush1.bf16.msra.mxu0 0
          %438 = vmatprep.subr.bf16.mxu0 0
          %439 = vmatpush1.bf16.msra.mxu0 0
          %440 = vmatprep.mubr.bf16.mxu0 0
          %441 = vmatmul.mubr.bf16.gmra.mrb[0].mxu0 %v406
          %v442 = vpop.f32.mrb[0].mxu0
          %v443 = vadd.f32 %v390, %v442
          %v444 = vpop.f32.mrb[0].mxu0
          %v445 = vpop.f32.mrb[0].mxu0
          %v446 = vpop.f32.mrb[0].mxu0
          %447 = vdwg.mxu0
          %v448 = vpack.c.bf16 %v443, %v443
          %vm449 = vcmask 125952
          %450 = vst.msk [vmem:[#allocation2] sm:$0xf] %vm449, %v448
        $region64: #{tpu_custom_call.1} parent=51 // pred_fallthru
          _
        %v451 = vld [vmem:[%s337] sm:$0xf]
        %v452 = vld [vmem:[%s2] sm:$0xf]
        %v453 = vld [vmem:[%s2 + $0x4] sm:$0xf]
        %v454 = vld [vmem:[%s2 + $0x8] sm:$0xf]
        %v455 = vld [vmem:[%s2 + $0xc] sm:$0xf]
        %v456 = vld [vmem:[%s3] sm:$0x1]
        %v458 = vlaneseq
        %v459 = vshrl.u32 %v458, 7
        %v460 = vsub.s32 0, %v459
        %v461 = vrot.slane %v456, %v460
        %v467 = vunpack.c.l.b16 %v452
        %v468 = vunpack.c.l.b16 %v453
        %v469 = vunpack.c.l.b16 %v454
        %v470 = vunpack.c.l.b16 %v455
        %v471 = vpack.c.b16 %v468, %v467
        %v472 = vpack.c.b16 %v470, %v469
        %vm475 = vcmask 261120
        %v477 = vsel %vm475, %v451, 0
        %479 = vmatprep.subr.bf16.mxu0 0
        %480 = vmatpush1.bf16.msra.mxu0 %v471
        %481 = vmatprep.subr.bf16.mxu0 0
        %482 = vmatpush1.bf16.msra.mxu0 %v472
        %483 = vmatprep.subr.bf16.mxu0 0
        %484 = vmatpush1.bf16.msra.mxu0 0
        %485 = vmatprep.subr.bf16.mxu0 0
        %486 = vmatpush1.bf16.msra.mxu0 0
        %487 = vmatprep.subr.bf16.mxu0 0
        %488 = vmatpush1.bf16.msra.mxu0 0
        %489 = vmatprep.subr.bf16.mxu0 0
        %490 = vmatpush1.bf16.msra.mxu0 0
        %491 = vmatprep.subr.bf16.mxu0 0
        %492 = vmatpush1.bf16.msra.mxu0 0
        %493 = vmatprep.subr.bf16.mxu0 0
        %494 = vmatpush1.bf16.msra.mxu0 0
        %495 = vmatprep.subr.bf16.mxu0 0
        %496 = vmatpush1.bf16.msra.mxu0 0
        %497 = vmatprep.subr.bf16.mxu0 0
        %498 = vmatpush1.bf16.msra.mxu0 0
        %499 = vmatprep.subr.bf16.mxu0 0
        %500 = vmatpush1.bf16.msra.mxu0 0
        %501 = vmatprep.subr.bf16.mxu0 0
        %502 = vmatpush1.bf16.msra.mxu0 0
        %503 = vmatprep.subr.bf16.mxu0 0
        %504 = vmatpush1.bf16.msra.mxu0 0
        %505 = vmatprep.subr.bf16.mxu0 0
        %506 = vmatpush1.bf16.msra.mxu0 0
        %507 = vmatprep.subr.bf16.mxu0 0
        %508 = vmatpush1.bf16.msra.mxu0 0
        %509 = vmatprep.subr.bf16.mxu0 0
        %510 = vmatpush1.bf16.msra.mxu0 0
        %511 = vmatprep.mubr.bf16.mxu0 0
        %512 = vmatmul.mubr.bf16.gmra.mrb[0].mxu0 %v477
        %v513 = vpop.f32.mrb[0].mxu0
        %v514 = vadd.f32 %v461, %v513
        %v515 = vpop.f32.mrb[0].mxu0
        %v516 = vpop.f32.mrb[0].mxu0
        %v517 = vpop.f32.mrb[0].mxu0
        %518 = vdwg.mxu0
        %v519 = vmul.f32 %v514, 0.35355338
        %v520 = vpack.c.bf16 %v519, %v519
        %v521 = vld [vmem:[#allocation2] sm:$0xf]
        %v523 = vrot.slane %v520, 4
        %524 = vrot.lane.b32.xlu0 %v523, 120
        %v525 = vpop.permute.xlu0 %524
        %526 = vrot.lane.b32.xlu0 %v520, 112
        %v527 = vpop.permute.xlu0 %526
        %528 = vrot.lane.b32.xlu0 %v523, 104
        %v529 = vpop.permute.xlu0 %528
        %vm530 = vcmask 1043456
        %v533 = vsel %vm530, %v520, %v525
        %v536 = vsel %vm530, %v527, %v529
        %vm537 = vcmask 64512
        %v538 = vsel %vm537, %v533, 0
        %v540 = vsel %vm537, %v536, 0
        %v543 = vsel %vm537, %v521, 0
        %545 = vmatprep.subr.bf16.mxu0 0
        %546 = vmatpush1.bf16.xpose.msra.mxu0 %v543
        %547 = vmatprep.subr.bf16.mxu0 0
        %548 = vmatpush1.bf16.xpose.msra.mxu0 0
        %549 = vmatprep.subr.bf16.mxu0 0
        %550 = vmatpush1.bf16.xpose.msra.mxu0 0
        %551 = vmatprep.subr.bf16.mxu0 0
        %552 = vmatpush1.bf16.xpose.msra.mxu0 0
        %553 = vmatprep.subr.bf16.mxu0 0
        %554 = vmatpush1.bf16.xpose.msra.mxu0 0
        %555 = vmatprep.subr.bf16.mxu0 0
        %556 = vmatpush1.bf16.xpose.msra.mxu0 0
        %557 = vmatprep.subr.bf16.mxu0 0
        %558 = vmatpush1.bf16.xpose.msra.mxu0 0
        %559 = vmatprep.subr.bf16.mxu0 0
        %560 = vmatpush1.bf16.xpose.msra.mxu0 0
        %561 = vmatprep.subr.bf16.mxu0 0
        %562 = vmatpush1.bf16.xpose.msra.mxu0 0
        %563 = vmatprep.subr.bf16.mxu0 0
        %564 = vmatpush1.bf16.xpose.msra.mxu0 0
        %565 = vmatprep.subr.bf16.mxu0 0
        %566 = vmatpush1.bf16.xpose.msra.mxu0 0
        %567 = vmatprep.subr.bf16.mxu0 0
        %568 = vmatpush1.bf16.xpose.msra.mxu0 0
        %569 = vmatprep.subr.bf16.mxu0 0
        %570 = vmatpush1.bf16.xpose.msra.mxu0 0
        %571 = vmatprep.subr.bf16.mxu0 0
        %572 = vmatpush1.bf16.xpose.msra.mxu0 0
        %573 = vmatprep.subr.bf16.mxu0 0
        %574 = vmatpush1.bf16.xpose.msra.mxu0 0
        %575 = vmatprep.subr.bf16.mxu0 0
        %576 = vmatpush1.bf16.xpose.msra.mxu0 0
        %577 = vmatprep.mubr.bf16.mxu0 0
        %578 = vmatmul.mubr.bf16.gmra.mrb[0].mxu0 %v538
        %v579 = vpop.f32.mrb[0].mxu0
        %v580 = vadd.f32 0.0, %v579
        %v581 = vpop.f32.mrb[0].mxu0
        %v582 = vpop.f32.mrb[0].mxu0
        %v583 = vadd.f32 0.0, %v582
        %v584 = vpop.f32.mrb[0].mxu0
        %585 = vmatprep.mubr.bf16.mxu0 0
        %586 = vmatmul.mubr.bf16.gmra.mrb[0].mxu0 %v540
        %v587 = vpop.f32.mrb[0].mxu0
        %v588 = vadd.f32 0.0, %v587
        %v589 = vpop.f32.mrb[0].mxu0
        %v590 = vpop.f32.mrb[0].mxu0
        %v591 = vadd.f32 0.0, %v590
        %v592 = vpop.f32.mrb[0].mxu0
        %593 = vdwg.mxu0
        %v594 = vsel %vm537, %v580, -inf
        %595 = vmax.xlane.f32.xlu0 %v594
        %v596 = vpop.xlane.xlu0 %595
        %v597 = vsel %vm537, %v583, -inf
        %598 = vmax.xlane.f32.xlu0 %v597
        %v599 = vpop.xlane.xlu0 %598
        %v600 = vsel %vm537, %v588, -inf
        %601 = vmax.xlane.f32.xlu0 %v600
        %v602 = vpop.xlane.xlu0 %601
        %v603 = vsel %vm537, %v591, -inf
        %604 = vmax.xlane.f32.xlu0 %v603
        %v605 = vpop.xlane.xlu0 %604
        %v606 = vsub.f32 %v580, %v596
        %v607 = vsub.f32 %v583, %v599
        %v608 = vsub.f32 %v588, %v602
        %v609 = vsub.f32 %v591, %v605
        %v610 = vmul.f32 %v606, 1.442695
        %v611 = vpow.pop %v610
        %v612 = vmul.f32 %v607, 1.442695
        %v613 = vpow.pop %v612
        %v614 = vmul.f32 %v608, 1.442695
        %v615 = vpow.pop %v614
        %v616 = vmul.f32 %v609, 1.442695
        %v617 = vpow.pop %v616
        %v618 = vsel %vm537, %v611, 0.0
        %619 = vadd.xlane.f32.xlu0 %v618
        %v620 = vpop.xlane.xlu0 %619
        %v621 = vsel %vm537, %v613, 0.0
        %622 = vadd.xlane.f32.xlu0 %v621
        %v623 = vpop.xlane.xlu0 %622
        %v624 = vsel %vm537, %v615, 0.0
        %625 = vadd.xlane.f32.xlu0 %v624
        %v626 = vpop.xlane.xlu0 %625
        %v627 = vsel %vm537, %v617, 0.0
        %628 = vadd.xlane.f32.xlu0 %v627
        %v629 = vpop.xlane.xlu0 %628
        %v630 = vrcp.pop %v620
        %v631 = vrcp.pop %v623
        %v632 = vrcp.pop %v626
        %v633 = vrcp.pop %v629
        %v634 = vmul.f32 %v611, %v630
        %v635 = vmul.f32 %v613, %v631
        %v636 = vmul.f32 %v615, %v632
        %v637 = vmul.f32 %v617, %v633
        %v638 = vpack.c.bf16 %v635, %v634
        %v639 = vpack.c.bf16 %v637, %v636
        %v641 = vunpack.c.l.b16 %v521
        %v642 = vpack.c.b16 %v641, %v641
        %643 = vrot.lane.b32.xlu0 %v642, 120
        %v644 = vpop.permute.xlu0 %643
        %v646 = vsel %vm537, %v638, 0
        %v649 = vsel %vm537, %v639, 0
        %v652 = vsel %vm530, %v644, 0
        %654 = vmatprep.subr.bf16.mxu0 0
        %655 = vmatpush1.bf16.msra.mxu0 %v652
        %656 = vmatprep.subr.bf16.mxu0 0
        %657 = vmatpush1.bf16.msra.mxu0 0
        %658 = vmatprep.subr.bf16.mxu0 0
        %659 = vmatpush1.bf16.msra.mxu0 0
        %660 = vmatprep.subr.bf16.mxu0 0
        %661 = vmatpush1.bf16.msra.mxu0 0
        %662 = vmatprep.subr.bf16.mxu0 0
        %663 = vmatpush1.bf16.msra.mxu0 0
        %664 = vmatprep.subr.bf16.mxu0 0
        %665 = vmatpush1.bf16.msra.mxu0 0
        %666 = vmatprep.subr.bf16.mxu0 0
        %667 = vmatpush1.bf16.msra.mxu0 0
        %668 = vmatprep.subr.bf16.mxu0 0
        %669 = vmatpush1.bf16.msra.mxu0 0
        %670 = vmatprep.subr.bf16.mxu0 0
        %671 = vmatpush1.bf16.msra.mxu0 0
        %672 = vmatprep.subr.bf16.mxu0 0
        %673 = vmatpush1.bf16.msra.mxu0 0
        %674 = vmatprep.subr.bf16.mxu0 0
        %675 = vmatpush1.bf16.msra.mxu0 0
        %676 = vmatprep.subr.bf16.mxu0 0
        %677 = vmatpush1.bf16.msra.mxu0 0
        %678 = vmatprep.subr.bf16.mxu0 0
        %679 = vmatpush1.bf16.msra.mxu0 0
        %680 = vmatprep.subr.bf16.mxu0 0
        %681 = vmatpush1.bf16.msra.mxu0 0
        %682 = vmatprep.subr.bf16.mxu0 0
        %683 = vmatpush1.bf16.msra.mxu0 0
        %684 = vmatprep.subr.bf16.mxu0 0
        %685 = vmatpush1.bf16.msra.mxu0 0
        %686 = vmatprep.mubr.bf16.mxu0 0
        %687 = vmatmul.mubr.bf16.gmra.mrb[0].mxu0 %v646
        %v688 = vpop.f32.mrb[0].mxu0
        %v689 = vadd.f32 0.0, %v688
        %v690 = vpop.f32.mrb[0].mxu0
        %v691 = vpop.f32.mrb[0].mxu0
        %v692 = vadd.f32 0.0, %v691
        %v693 = vpop.f32.mrb[0].mxu0
        %694 = vmatprep.mubr.bf16.mxu0 0
        %695 = vmatmul.mubr.bf16.gmra.mrb[0].mxu0 %v649
        %v696 = vpop.f32.mrb[0].mxu0
        %v697 = vadd.f32 0.0, %v696
        %v698 = vpop.f32.mrb[0].mxu0
        %v699 = vpop.f32.mrb[0].mxu0
        %v700 = vadd.f32 0.0, %v699
        %v701 = vpop.f32.mrb[0].mxu0
        %702 = vdwg.mxu0
        %704 = vrot.lane.b32.xlu0 %v692, 8
        %v705 = vpop.permute.xlu0 %704
        %708 = vrot.lane.b32.xlu0 %v697, 16
        %v709 = vpop.permute.xlu0 %708
        %712 = vrot.lane.b32.xlu0 %v700, 24
        %v713 = vpop.permute.xlu0 %712
        %v715 = vsel %vm537, %v689, %v705
        %vm716 = vcmask 130048
        %v717 = vsel %vm716, %v715, %v709
        %vm718 = vcmask 195584
        %v719 = vsel %vm718, %v717, %v713
        %v720 = vpack.c.bf16 %v719, %v719
        %v721 = vld [vmem:[%s6] sm:$0xf]
        %v722 = vld [vmem:[%s6 + $0x4] sm:$0xf]
        %v723 = vld [vmem:[%s6 + $0x8] sm:$0xf]
        %v724 = vld [vmem:[%s6 + $0xc] sm:$0xf]
        %v725 = vld [vmem:[%s7] sm:$0x1]
        %v727 = vlaneseq
        %v728 = vshrl.u32 %v727, 7
        %v729 = vsub.s32 0, %v728
        %v730 = vrot.slane %v725, %v729
        %v736 = vunpack.c.l.b16 %v721
        %v737 = vunpack.c.l.b16 %v722
        %v738 = vunpack.c.l.b16 %v723
        %v739 = vunpack.c.l.b16 %v724
        %v740 = vpack.c.b16 %v737, %v736
        %v741 = vpack.c.b16 %v739, %v738
        %v745 = vsel %vm475, %v720, 0
        %747 = vmatprep.subr.bf16.mxu0 0
        %748 = vmatpush1.bf16.msra.mxu0 %v740
        %749 = vmatprep.subr.bf16.mxu0 0
        %750 = vmatpush1.bf16.msra.mxu0 %v741
        %751 = vmatprep.subr.bf16.mxu0 0
        %752 = vmatpush1.bf16.msra.mxu0 0
        %753 = vmatprep.subr.bf16.mxu0 0
        %754 = vmatpush1.bf16.msra.mxu0 0
        %755 = vmatprep.subr.bf16.mxu0 0
        %756 = vmatpush1.bf16.msra.mxu0 0
        %757 = vmatprep.subr.bf16.mxu0 0
        %758 = vmatpush1.bf16.msra.mxu0 0
        %759 = vmatprep.subr.bf16.mxu0 0
        %760 = vmatpush1.bf16.msra.mxu0 0
        %761 = vmatprep.subr.bf16.mxu0 0
        %762 = vmatpush1.bf16.msra.mxu0 0
        %763 = vmatprep.subr.bf16.mxu0 0
        %764 = vmatpush1.bf16.msra.mxu0 0
        %765 = vmatprep.subr.bf16.mxu0 0
        %766 = vmatpush1.bf16.msra.mxu0 0
        %767 = vmatprep.subr.bf16.mxu0 0
        %768 = vmatpush1.bf16.msra.mxu0 0
        %769 = vmatprep.subr.bf16.mxu0 0
        %770 = vmatpush1.bf16.msra.mxu0 0
        %771 = vmatprep.subr.bf16.mxu0 0
        %772 = vmatpush1.bf16.msra.mxu0 0
        %773 = vmatprep.subr.bf16.mxu0 0
        %774 = vmatpush1.bf16.msra.mxu0 0
        %775 = vmatprep.subr.bf16.mxu0 0
        %776 = vmatpush1.bf16.msra.mxu0 0
        %777 = vmatprep.subr.bf16.mxu0 0
        %778 = vmatpush1.bf16.msra.mxu0 0
        %779 = vmatprep.mubr.bf16.mxu0 0
        %780 = vmatmul.mubr.bf16.gmra.mrb[0].mxu0 %v745
        %v781 = vpop.f32.mrb[0].mxu0
        %v782 = vadd.f32 %v730, %v781
        %v783 = vpop.f32.mrb[0].mxu0
        %v784 = vpop.f32.mrb[0].mxu0
        %v785 = vpop.f32.mrb[0].mxu0
        %786 = vdwg.mxu0
        %787 = vst.msk [vmem:[%s374] sm:$0xff] %vm475, %v782
        %s788 = sand.u32 %s230, 1
        %s789 = scalar_lea.sflag [#allocation5], %s788
        %s790 = sand.u32 %s230, 1
        %s791 = smul.addr %s790, 8
        %s792 = scalar_lea.vmem [#allocation8], %s791
        // Predicated region
        $region65: #{tpu_custom_call.1} parent=51 // pred_check
          %p793 = pneg %p240
        $region66: #{tpu_custom_call.1} parent=51 // pred_check_branch
          %795 = sbr.rel (%p793) target = $region68
        $region67: #{tpu_custom_call.1} parent=51 // pred_region
          %s797 = ssub.s32 128, 128
          %798 = vsyncadd %s789, %s797
          %s799 = sadd.s32 %s33, %s32
          %s800 = smul.addr %s799, 128
          %s801 = scalar_lea.hbm %s8, %s800
          %s803 = sshll.u32 %s792, 4
          %s804 = int_to_ptr.vmem [resolvable:$true] %s803
          %806 = dma.vmem_to_hbm [thread:$0]  %s804, 128, %s801, %s789
        $region68: #{tpu_custom_call.1} parent=51 // pred_fallthru
          _
      $region52: #{tpu_custom_call.1} parent=5 // pred_fallthru
        _
      %p807 = scmp.le.s32.totalorder 2, %s23
      // Predicated region
      $region69: #{tpu_custom_call.1} parent=5 // pred_check
        %p808 = pneg %p807
      $region70: #{tpu_custom_call.1} parent=5 // pred_check_branch
        %810 = sbr.rel (%p808) target = $region72
      $region71: #{tpu_custom_call.1} parent=5 // pred_region
        %s811 = ssub.s32 %s23, 2
        // Predicated region
        $region73: #{tpu_custom_call.1} parent=71 // pred_check
          %p812 = pneg %p246
        $region74: #{tpu_custom_call.1} parent=71 // pred_check_branch
          %814 = sbr.rel (%p812) target = $region76
        $region75: #{tpu_custom_call.1} parent=71 // pred_region
          %s815 = sand.u32 %s231, 1
          %s816 = scalar_lea.sflag [#allocation5], %s815
          %s817 = sand.u32 %s231, 1
          %s818 = smul.addr %s817, 8
          %s819 = scalar_lea.vmem [#allocation8], %s818
          %820 = dma.done %s816, 128
        $region76: #{tpu_custom_call.1} parent=71 // pred_fallthru
          _
      $region72: #{tpu_custom_call.1} parent=5 // pred_fallthru
        _
    $region6: #{tpu_custom_call.1} parent=1 // loop_footer
      %s27 = sadd.s32 1, %s23
    $region7: #{tpu_custom_call.1} parent=1 // loop_footer_branch
      %22 = sbr.rel target = $region3
    $region8: #{tpu_custom_call.1} parent=1 // loop_exit
      _
    %821 = vsyncpa [#allocation4], 1
    %s822 = scalar_lea.sflag [#allocation4], 1
    %823 = vsyncpa %s822, 1
    %824 = vsyncpa [#allocation7], 1
    %s825 = scalar_lea.sflag [#allocation7], 1
    %826 = vsyncpa %s825, 1
    %827 = vsyncpa [#allocation5], 1
    %s828 = scalar_lea.sflag [#allocation5], 1
    %829 = vsyncpa %s828, 1

</llo_original>
